<compile_context>
chip_gen: v7x
topology: tpu7x:2x2x1
jax: 0.10.0
libtpu: 0.0.40
codegen_flags: <defaults>
</compile_context>

<pallas_src>
import jax
import jax.numpy as jnp
from jax.experimental import pallas as pl
from jax.experimental.pallas import tpu as pltpu


def _scaled_conv1x1_kernel(s_ref, x_ref, w_ref, o_ref):
    """o = (w * s) @ x for one Cout tile of one batch element.

    s_ref: (1, Cinp)     per-channel scale (lane-aligned with Cin, sublane-broadcast)
    x_ref: (Cinp, HWp)   activations of this batch element (channels on sublanes)
    w_ref: (tco, Cinp)   slice of the 1x1-conv weight
    o_ref: (tco, HWp)
    """
    ws = w_ref[...] * s_ref[...]                       # fold diag(scale) into W (VPU, ~1 MB bf16)
    o_ref[...] = jnp.dot(
        ws, x_ref[...], preferred_element_type=jnp.float32
    ).astype(o_ref.dtype)


def _round_up(x, m):
    return ((x + m - 1) // m) * m


def _pick_cout_tiling(cout, cin_p, elem_bytes, max_block_bytes=2 * 1024 * 1024):
    """Pick (tile, num_blocks) for the Cout grid axis.

    tile is a multiple of 8; the caller pads Cout up to tile * num_blocks.
    Preference order: even block count in [4, 8] (balanced split across v7x's two
    TensorCores, enough blocks to hide the DMA prologue/epilogue), then any even
    count, then whatever fits.  Each weight block stays under max_block_bytes.
    """
    cap = max(8, min(512, (max_block_bytes // max(cin_p * elem_bytes, 1)) // 8 * 8))

    def plan(nb):
        tile = min(_round_up(pl.cdiv(cout, nb), 8), cap)
        return tile, pl.cdiv(cout, tile)

    best = None
    for nb in (4, 6, 8, 2, 10, 12, 16, 24, 32, 48, 64, 128):
        tile, blocks = plan(nb)
        if blocks % 2 == 0 and 4 <= blocks <= 8:
            return tile, blocks
        if best is None:
            best = (tile, blocks)
        elif blocks % 2 == 0 and best[1] % 2 != 0:
            best = (tile, blocks)
    return best


def module_forward(x679, x674, conv_w, *, compute_dtype=jnp.bfloat16):
    """Equivalent of M.forward: (x679 * x674) -> Conv2d(Cin, Cout, 1x1, bias=False).

    Streams all operands in `compute_dtype` (bf16 by default; the MXU accumulates in f32,
    the output keeps x674's dtype).  Pass compute_dtype=jnp.float32 for full precision.
    """
    N, Cin, H, W = x674.shape
    Cout = conv_w.shape[0]
    HW = H * W
    out_dtype = x674.dtype

    # Free reshapes (no relayout): NCHW is already channel-major.  Cast once for streaming.
    x3 = x674.reshape(N, Cin, HW).astype(compute_dtype)     # (N, Cin, HW)
    s3 = x679.reshape(N, 1, Cin).astype(compute_dtype)      # (N, 1, Cin)  lane-major scale
    w2 = conv_w.reshape(Cout, Cin).astype(compute_dtype)    # (Cout, Cin)

    elem_bytes = jnp.dtype(compute_dtype).itemsize
    Cinp = _round_up(Cin, 128)                 # contraction dim -> lane multiple
    HWp = _round_up(HW, 128)                   # MXU N-dim / output lanes -> 128 multiple
    tco, nblocks = _pick_cout_tiling(Cout, Cinp, elem_bytes)
    Coutp = tco * nblocks

    # Zero padding is exact: zero weight columns/rows and zero x columns contribute nothing.
    if Cinp != Cin:
        x3 = jnp.pad(x3, ((0, 0), (0, Cinp - Cin), (0, 0)))
        s3 = jnp.pad(s3, ((0, 0), (0, 0), (0, Cinp - Cin)))
        w2 = jnp.pad(w2, ((0, 0), (0, Cinp - Cin)))
    if HWp != HW:
        x3 = jnp.pad(x3, ((0, 0), (0, 0), (0, HWp - HW)))
    if Coutp != Cout:
        w2 = jnp.pad(w2, ((0, Coutp - Cout), (0, 0)))

    # Cout-block axis outer, batch inner: weight blocks stream exactly once; x (small) is the
    # operand re-fetched across the batch.  For the module's N=1 both are fetched once.
    grid = (nblocks, N)

    out3 = pl.pallas_call(
        _scaled_conv1x1_kernel,
        out_shape=jax.ShapeDtypeStruct((N, Coutp, HWp), out_dtype),
        grid=grid,
        in_specs=[
            pl.BlockSpec((None, 1, Cinp), lambda i, b: (b, 0, 0)),    # scale (7 KB, per batch)
            pl.BlockSpec((None, Cinp, HWp), lambda i, b: (b, 0, 0)),  # activations (per batch)
            pl.BlockSpec((tco, Cinp), lambda i, b: (i, 0)),           # weight tile (once total)
        ],
        out_specs=pl.BlockSpec((None, tco, HWp), lambda i, b: (b, i, 0)),
        compiler_params=pltpu.CompilerParams(
            dimension_semantics=("parallel", "parallel")
        ),
    )(s3, x3, w2)

    out3 = out3[:, :Cout, :HW]
    return out3.reshape(N, Cout, H, W)


if __name__ == "__main__":
    # Small shapes consistent with the module (real module: N=1, Cin=3456, Cout=576, 7x7).
    N, Cin, Cout, H, W = 1, 384, 576, 7, 7

    key = jax.random.PRNGKey(0)
    k1, k2, k3 = jax.random.split(key, 3)
    x674 = jax.random.normal(k1, (N, Cin, H, W), dtype=jnp.float32)
    x679 = jax.random.normal(k2, (N, Cin, 1, 1), dtype=jnp.float32)
    conv_w = jax.random.normal(k3, (Cout, Cin, 1, 1), dtype=jnp.float32) * 0.02

    out = jax.jit(module_forward)(x679, x674, conv_w)
    out = jax.block_until_ready(out)
    assert out.shape == (N, Cout, H, W), out.shape

    # Pure-JAX reference with matched bf16 quantization (scale folded into W, f32 accumulation).
    wb = conv_w.reshape(Cout, Cin).astype(jnp.bfloat16).astype(jnp.float32)
    sb = x679.reshape(N, Cin).astype(jnp.bfloat16).astype(jnp.float32)
    xb = x674.reshape(N, Cin, H * W).astype(jnp.bfloat16).astype(jnp.float32)
    ws = (wb[None, :, :] * sb[:, None, :]).astype(jnp.bfloat16).astype(jnp.float32)
    ref = jnp.einsum(
        "noc,nch->noh", ws, xb, precision=jax.lax.Precision.HIGHEST
    ).reshape(N, Cout, H, W)

    max_err = float(jnp.max(jnp.abs(out - ref)))
    assert jnp.allclose(out, ref, atol=5e-3, rtol=5e-3), max_err

    print("KERNEL_OK")
</pallas_src>

<mosaic_0001>
module attributes {stable_mosaic.version = 11 : i64} {
  func.func @_scaled_conv1x1_kernel(%arg0: i32, %arg1: i32, %arg2: memref<1x1x384xbf16, #tpu.memory_space<vmem>>, %arg3: memref<1x384x128xbf16, #tpu.memory_space<vmem>>, %arg4: memref<144x384xbf16, #tpu.memory_space<vmem>>, %arg5: memref<1x144x128xf32, #tpu.memory_space<vmem>>) attributes {dimension_semantics = [#tpu.dimension_semantics<parallel>, #tpu.dimension_semantics<parallel>], iteration_bounds = array<i64: 4, 1>, scalar_prefetch = 0 : i64, scratch_operands = 0 : i64, tpu.core_type = #tpu.core_type<tc>, window_params = [{transform_indices = @transform_0, window_bounds = array<i64: 1, 1, 384>}, {transform_indices = @transform_1, window_bounds = array<i64: 1, 384, 128>}, {transform_indices = @transform_2, window_bounds = array<i64: 144, 384>}, {transform_indices = @transform_3, window_bounds = array<i64: 1, 144, 128>}]} {
    %c0 = arith.constant 0 : index
    %c0_0 = arith.constant 0 : index
    %0 = vector.load %arg4[%c0, %c0_0] : memref<144x384xbf16, #tpu.memory_space<vmem>>, vector<144x384xbf16>
    %c0_1 = arith.constant 0 : index
    %c0_2 = arith.constant 0 : index
    %c0_3 = arith.constant 0 : index
    %1 = vector.load %arg2[%c0_1, %c0_2, %c0_3] : memref<1x1x384xbf16, #tpu.memory_space<vmem>>, vector<1x1x384xbf16>
    %2 = vector.shape_cast %1 : vector<1x1x384xbf16> to vector<1x384xbf16>
    %3 = vector.broadcast %2 : vector<1x384xbf16> to vector<144x384xbf16>
    %4 = arith.mulf %0, %3 : vector<144x384xbf16>
    %c0_4 = arith.constant 0 : index
    %c0_5 = arith.constant 0 : index
    %c0_6 = arith.constant 0 : index
    %5 = vector.load %arg3[%c0_4, %c0_5, %c0_6] : memref<1x384x128xbf16, #tpu.memory_space<vmem>>, vector<1x384x128xbf16>
    %6 = vector.shape_cast %5 : vector<1x384x128xbf16> to vector<384x128xbf16>
    %cst = arith.constant dense<0.000000e+00> : vector<144x128xf32>
    %7 = tpu.matmul %4, %6, %cst {dimension_numbers = #tpu.dot_dimension_numbers<[1], [0], [0], [1], [0, 0, 1, 1], [], []>} : vector<144x384xbf16>, vector<384x128xbf16>, vector<144x128xf32> -> vector<144x128xf32>
    %c0_7 = arith.constant 0 : index
    %c0_8 = arith.constant 0 : index
    %c0_9 = arith.constant 0 : index
    %8 = vector.load %arg5[%c0_7, %c0_8, %c0_9] : memref<1x144x128xf32, #tpu.memory_space<vmem>>, vector<1x144x128xf32>
    %9 = vector.shape_cast %8 : vector<1x144x128xf32> to vector<144x128xf32>
    %10 = vector.shape_cast %7 : vector<144x128xf32> to vector<1x144x128xf32>
    tpu.vector_store %arg5[%c0_7, %c0_8, %c0_9], %10 {strides = array<i32>} : memref<1x144x128xf32, #tpu.memory_space<vmem>>, vector<1x144x128xf32>,
    return
  }
  func.func @transform_0(%arg0: i32, %arg1: i32) -> (i32, i32, i32) {
    %c0_i32 = arith.constant 0 : i32
    %c0_i32_0 = arith.constant 0 : i32
    %c0_i32_1 = arith.constant 0 : i32
    return %arg1, %c0_i32, %c0_i32_0 : i32, i32, i32
  }
  func.func @transform_1(%arg0: i32, %arg1: i32) -> (i32, i32, i32) {
    %c0_i32 = arith.constant 0 : i32
    %c0_i32_0 = arith.constant 0 : i32
    %c0_i32_1 = arith.constant 0 : i32
    return %arg1, %c0_i32, %c0_i32_0 : i32, i32, i32
  }
  func.func @transform_2(%arg0: i32, %arg1: i32) -> (i32, i32) {
    %c0_i32 = arith.constant 0 : i32
    %c0_i32_0 = arith.constant 0 : i32
    return %arg0, %c0_i32 : i32, i32
  }
  func.func @transform_3(%arg0: i32, %arg1: i32) -> (i32, i32, i32) {
    %c0_i32 = arith.constant 0 : i32
    %c0_i32_0 = arith.constant 0 : i32
    return %arg1, %arg0, %c0_i32 : i32, i32, i32
  }
}

</mosaic_0001>

<llo_original>
// kernel: module_forward.1
$region0: #{module_forward.1}
  #allocation0 [shape = 'u32[]', space=smem, size = 0x4, offset = 0x4, fixed_abs, tag = 'smem constant byte address 0x4 - core index']
  #allocation1 [shape = 'u32[144,128]{1,0:T(1,128)}', space=vmem, size = 0x12000, scoped, tag = 'internal scratch']
  %s0 = inlined_call_operand.vmem [shape: bf16[1,1,384], index: 0, kind: input, shape index: {}]
  %s1 = inlined_call_operand.vmem [shape: bf16[1,384,128], index: 1, kind: input, shape index: {}]
  %s2 = inlined_call_operand.vmem [shape: bf16[576,384], index: 2, kind: input, shape index: {}]
  %s3 = inlined_call_operand.vmem [shape: f32[1,576,128], index: 3, kind: output, shape index: {}]
  %s4 = sld [smem:[#allocation0]]
  $region45: #{module_forward.1} parent=0
    _
  %s6 = ssub.s32 1, %s4
  %s7 = scalar_select 0, %s6, %s4
  loop: start=0, step=1, limit=6
  $region2: #{module_forward.1} parent=0 // loop_pre_header
    _
  $region3: #{module_forward.1} parent=0 // loop_header
    %s9 = sphi 0, %s13
    %p10 = scmp.ge.s32.totalorder %s9, 6
    %s16 = sphi 0, %s28
    %s17 = sphi 0, %s24
    %s18 = sphi 0, %s16
    %s19 = sphi 0, %s17
    %s20 = sphi 0, %s18
    %s21 = sphi 0, %s19
    %s31 = sphi 0, %s33
    %s34 = sphi 0, %s31
    %s35 = sphi 0, %s34
    %s51 = sphi 0, %s35
    %s57 = sphi 0, %s59
    %s60 = sphi 0, %s57
    %s61 = sphi 0, %s60
    %s77 = sphi 0, %s61
    %s83 = sphi 0, %s85
    %s86 = sphi 0, %s83
    %s87 = sphi 0, %s86
    %s103 = sphi 0, %s87
    %s111 = sphi 0, %s113
    %s114 = sphi 0, %s111
    %s115 = sphi 0, %s114
    %s131 = sphi 0, %s115
  $region4: #{module_forward.1} parent=0 // loop_header_branch
    %12 = sbr.rel (%p10) target = $region8
  $region5: #{module_forward.1} parent=0 // loop_body
    %s14 = ssub.s32 %s9, 1
    %s15 = ssub.s32 %s9, 2
    %s22 = sadd.s32 1, %s17
    %p23 = scmp.ge.s32.totalorder %s22, 1
    %s24 = scalar_select %p23, 0, %s22
    %s25 = sadd.s32 1, %s16
    %s26 = scalar_select %p23, %s25, %s16
    %p27 = scmp.ge.s32.totalorder %s26, 4
    %s28 = scalar_select %p27, 0, %s26
    %s29 = ssub.s32 %s17, %s24
    %p30 = scmp.eq.s32.totalorder %s29, 0
    %s32 = sadd.s32 %s31, 1
    %s33 = scalar_select %p30, %s31, %s32
    %p36 = pneg %p30
    %p37 = scmp.eq.s32.totalorder %s9, 3
    %p38 = por %p36, %p37
    %p39 = scmp.ne.s32.totalorder %s31, %s34
    %p40 = scmp.eq.s32.totalorder %s9, 0
    %p41 = por %p39, %p40
    %p42 = scmp.ne.s32.totalorder %s31, %s34
    %p43 = scmp.eq.s32.totalorder %s14, 3
    %p44 = por %p42, %p43
    %p45 = scmp.ne.s32.totalorder %s34, %s35
    %p46 = scmp.eq.s32.totalorder %s14, 0
    %p47 = por %p45, %p46
    %p48 = scmp.ne.s32.totalorder %s34, %s35
    %p49 = scmp.eq.s32.totalorder %s15, 3
    %p50 = por %p48, %p49
    %p52 = scmp.ne.s32.totalorder %s35, %s51
    %p53 = scmp.eq.s32.totalorder %s15, 0
    %p54 = por %p52, %p53
    %s55 = ssub.s32 %s17, %s24
    %p56 = scmp.eq.s32.totalorder %s55, 0
    %s58 = sadd.s32 %s57, 1
    %s59 = scalar_select %p56, %s57, %s58
    %p62 = pneg %p56
    %p63 = scmp.eq.s32.totalorder %s9, 3
    %p64 = por %p62, %p63
    %p65 = scmp.ne.s32.totalorder %s57, %s60
    %p66 = scmp.eq.s32.totalorder %s9, 0
    %p67 = por %p65, %p66
    %p68 = scmp.ne.s32.totalorder %s57, %s60
    %p69 = scmp.eq.s32.totalorder %s14, 3
    %p70 = por %p68, %p69
    %p71 = scmp.ne.s32.totalorder %s60, %s61
    %p72 = scmp.eq.s32.totalorder %s14, 0
    %p73 = por %p71, %p72
    %p74 = scmp.ne.s32.totalorder %s60, %s61
    %p75 = scmp.eq.s32.totalorder %s15, 3
    %p76 = por %p74, %p75
    %p78 = scmp.ne.s32.totalorder %s61, %s77
    %p79 = scmp.eq.s32.totalorder %s15, 0
    %p80 = por %p78, %p79
    %s81 = ssub.s32 %s16, %s28
    %p82 = scmp.eq.s32.totalorder %s81, 0
    %s84 = sadd.s32 %s83, 1
    %s85 = scalar_select %p82, %s83, %s84
    %p88 = pneg %p82
    %p89 = scmp.eq.s32.totalorder %s9, 3
    %p90 = por %p88, %p89
    %p91 = scmp.ne.s32.totalorder %s83, %s86
    %p92 = scmp.eq.s32.totalorder %s9, 0
    %p93 = por %p91, %p92
    %p94 = scmp.ne.s32.totalorder %s83, %s86
    %p95 = scmp.eq.s32.totalorder %s14, 3
    %p96 = por %p94, %p95
    %p97 = scmp.ne.s32.totalorder %s86, %s87
    %p98 = scmp.eq.s32.totalorder %s14, 0
    %p99 = por %p97, %p98
    %p100 = scmp.ne.s32.totalorder %s86, %s87
    %p101 = scmp.eq.s32.totalorder %s15, 3
    %p102 = por %p100, %p101
    %p104 = scmp.ne.s32.totalorder %s87, %s103
    %p105 = scmp.eq.s32.totalorder %s15, 0
    %p106 = por %p104, %p105
    %s107 = ssub.s32 %s17, %s24
    %s108 = ssub.s32 %s16, %s28
    %s109 = sor.u32 %s107, %s108
    %p110 = scmp.eq.s32.totalorder %s109, 0
    %s112 = sadd.s32 %s111, 1
    %s113 = scalar_select %p110, %s111, %s112
    %p116 = pneg %p110
    %p117 = scmp.eq.s32.totalorder %s9, 3
    %p118 = por %p116, %p117
    %p119 = scmp.ne.s32.totalorder %s111, %s114
    %p120 = scmp.eq.s32.totalorder %s9, 0
    %p121 = por %p119, %p120
    %p122 = scmp.ne.s32.totalorder %s111, %s114
    %p123 = scmp.eq.s32.totalorder %s14, 3
    %p124 = por %p122, %p123
    %p125 = scmp.ne.s32.totalorder %s114, %s115
    %p126 = scmp.eq.s32.totalorder %s14, 0
    %p127 = por %p125, %p126
    %p128 = scmp.ne.s32.totalorder %s114, %s115
    %p129 = scmp.eq.s32.totalorder %s15, 3
    %p130 = por %p128, %p129
    %p132 = scmp.ne.s32.totalorder %s115, %s131
    %p133 = scmp.eq.s32.totalorder %s15, 0
    %p134 = por %p132, %p133
    %p135 = scmp.le.s32.totalorder 1, %s9
    %p136 = scmp.lt.s32.totalorder %s9, 5
    %p137 = pnand %p135, %p136
    %p138 = pneg %p137
    // Predicated region
    $region9: #{module_forward.1} parent=5 // pred_check
      _
    $region10: #{module_forward.1} parent=5 // pred_check_branch
      %140 = sbr.rel (%p137) target = $region12
    $region11: #{module_forward.1} parent=5 // pred_region
      %s141 = ssub.s32 %s9, 1
      // Predicated region
      $region13: #{module_forward.1} parent=11 // pred_check
        %p142 = pneg %p47
      $region14: #{module_forward.1} parent=11 // pred_check_branch
        %144 = sbr.rel (%p142) target = $region16
      $region15: #{module_forward.1} parent=11 // pred_region
        %p145 = scmp.lt.s32.totalorder %s19, 0
        %s146 = scalar_select %p145, %s19, 0
        %s147 = smul.addr %s146, 3
        %s148 = scalar_lea.vmem %s0, %s147
      $region16: #{module_forward.1} parent=11 // pred_fallthru
        _
      // Predicated region
      $region17: #{module_forward.1} parent=11 // pred_check
        %p149 = pneg %p73
      $region18: #{module_forward.1} parent=11 // pred_check_branch
        %151 = sbr.rel (%p149) target = $region20
      $region19: #{module_forward.1} parent=11 // pred_region
        %p152 = scmp.lt.s32.totalorder %s19, 0
        %s153 = scalar_select %p152, %s19, 0
        %s154 = smul.addr %s153, 48
        %s155 = smul.addr %s154, 4
        %s156 = scalar_lea.vmem %s1, %s155
      $region20: #{module_forward.1} parent=11 // pred_fallthru
        _
    $region12: #{module_forward.1} parent=5 // pred_fallthru
      _
    %p157 = scmp.lt.s32.totalorder %s9, 4
    // Predicated region
    $region21: #{module_forward.1} parent=5 // pred_check
      %p158 = pneg %p157
    $region22: #{module_forward.1} parent=5 // pred_check_branch
      %160 = sbr.rel (%p158) target = $region24
    $region23: #{module_forward.1} parent=5 // pred_region
      // Predicated region
      $region25: #{module_forward.1} parent=23 // pred_check
        %p161 = pneg %p93
      $region26: #{module_forward.1} parent=23 // pred_check_branch
        %163 = sbr.rel (%p161) target = $region28
      $region27: #{module_forward.1} parent=23 // pred_region
        %s164 = smul.u32 18, %s16
        %p165 = scmp.lt.s32.totalorder %s164, 71
        %s166 = scalar_select %p165, %s164, 71
        %s167 = smul.addr %s166, 3
        %s168 = smul.addr %s167, 4
        %s169 = scalar_lea.vmem %s2, %s168
        %s170 = smul.u32 18, %s16
      $region28: #{module_forward.1} parent=23 // pred_fallthru
        _
    $region24: #{module_forward.1} parent=5 // pred_fallthru
      _
    %p171 = scmp.le.s32.totalorder 1, %s9
    %p172 = scmp.lt.s32.totalorder %s9, 5
    %p173 = pnand %p171, %p172
    %p174 = pneg %p173
    // Predicated region
    $region29: #{module_forward.1} parent=5 // pred_check
      _
    $region30: #{module_forward.1} parent=5 // pred_check_branch
      %176 = sbr.rel (%p173) target = $region32
    $region31: #{module_forward.1} parent=5 // pred_region
      %s177 = ssub.s32 %s9, 1
      %p178 = scmp.lt.s32.totalorder %s19, 0
      %s179 = scalar_select %p178, %s19, 0
      %s180 = smul.addr %s179, 3
      %s181 = scalar_lea.vmem %s0, %s180
      %p182 = pneg %p47
      %p183 = pneg %p44
      %p184 = scmp.lt.s32.totalorder %s19, 0
      %s185 = scalar_select %p184, %s19, 0
      %s186 = smul.addr %s185, 48
      %s187 = smul.addr %s186, 4
      %s188 = scalar_lea.vmem %s1, %s187
      %p189 = pneg %p73
      %p190 = pneg %p70
      %s191 = smul.u32 18, %s18
      %p192 = scmp.lt.s32.totalorder %s191, 71
      %s193 = scalar_select %p192, %s191, 71
      %s194 = smul.addr %s193, 3
      %s195 = smul.addr %s194, 4
      %s196 = scalar_lea.vmem %s2, %s195
      %p197 = pneg %p99
      %p198 = pneg %p96
      %p199 = pneg %p127
      %p200 = pneg %p124
      %s201 = smul.u32 18, %s18
      %p202 = scmp.lt.s32.totalorder %s19, 0
      %s203 = scalar_select %p202, %s19, 0
      %p204 = scmp.lt.s32.totalorder %s201, 71
      %s205 = scalar_select %p204, %s201, 71
      %s206 = smul.addr %s203, 72
      %s207 = sadd.s32 %s205, %s206
      %s208 = smul.addr %s207, 8
      %s209 = scalar_lea.vmem %s3, %s208
      %p210 = scmp.lt.s32.totalorder %s19, 0
      %s211 = scalar_select %p210, %s19, 0
      %s212 = smul.addr %s211, 3
      %s213 = scalar_lea.vmem %s0, %s212
      %p214 = scmp.lt.s32.totalorder %s19, 0
      %s215 = scalar_select %p214, %s19, 0
      %s216 = smul.addr %s215, 48
      %s217 = smul.addr %s216, 4
      %s218 = scalar_lea.vmem %s1, %s217
      %s219 = smul.u32 18, %s18
      %p220 = scmp.lt.s32.totalorder %s219, 71
      %s221 = scalar_select %p220, %s219, 71
      %s222 = smul.addr %s221, 3
      %s223 = smul.addr %s222, 4
      %s224 = scalar_lea.vmem %s2, %s223
      %s225 = smul.u32 18, %s18
      %s226 = smul.u32 18, %s18
      %p227 = scmp.lt.s32.totalorder %s19, 0
      %s228 = scalar_select %p227, %s19, 0
      %p229 = scmp.lt.s32.totalorder %s226, 71
      %s230 = scalar_select %p229, %s226, 71
      %s231 = smul.addr %s228, 72
      %s232 = sadd.s32 %s230, %s231
      %s233 = smul.addr %s232, 8
      %s234 = scalar_lea.vmem %s3, %s233
      %s235 = smul.u32 18, %s18
      %v237 = vld [vmem:[%s224] sm:$0xff]
      %v238 = vld [vmem:[%s224 + $0x8] sm:$0xf]
      %v239 = vld [vmem:[%s224 + $0xc] sm:$0xff]
      %v240 = vld [vmem:[%s224 + $0x14] sm:$0xf]
      %v241 = vld [vmem:[%s224 + $0x18] sm:$0xff]
      %v242 = vld [vmem:[%s224 + $0x20] sm:$0xf]
      %v243 = vld [vmem:[%s224 + $0x24] sm:$0xff]
      %v244 = vld [vmem:[%s224 + $0x2c] sm:$0xf]
      %v245 = vld [vmem:[%s224 + $0x30] sm:$0xff]
      %v246 = vld [vmem:[%s224 + $0x38] sm:$0xf]
      %v247 = vld [vmem:[%s224 + $0x3c] sm:$0xff]
      %v248 = vld [vmem:[%s224 + $0x44] sm:$0xf]
      %v249 = vld [vmem:[%s224 + $0x48] sm:$0xff]
      %v250 = vld [vmem:[%s224 + $0x50] sm:$0xf]
      %v251 = vld [vmem:[%s224 + $0x54] sm:$0xff]
      %v252 = vld [vmem:[%s224 + $0x5c] sm:$0xf]
      %v253 = vld [vmem:[%s224 + $0x60] sm:$0xff]
      %v254 = vld [vmem:[%s224 + $0x68] sm:$0xf]
      %v255 = vld [vmem:[%s224 + $0x6c] sm:$0xff]
      %v256 = vld [vmem:[%s224 + $0x74] sm:$0xf]
      %v257 = vld [vmem:[%s224 + $0x78] sm:$0xff]
      %v258 = vld [vmem:[%s224 + $0x80] sm:$0xf]
      %v259 = vld [vmem:[%s224 + $0x84] sm:$0xff]
      %v260 = vld [vmem:[%s224 + $0x8c] sm:$0xf]
      %v261 = vld [vmem:[%s224 + $0x90] sm:$0xff]
      %v262 = vld [vmem:[%s224 + $0x98] sm:$0xf]
      %v263 = vld [vmem:[%s224 + $0x9c] sm:$0xff]
      %v264 = vld [vmem:[%s224 + $0xa4] sm:$0xf]
      %v265 = vld [vmem:[%s224 + $0xa8] sm:$0xff]
      %v266 = vld [vmem:[%s224 + $0xb0] sm:$0xf]
      %v267 = vld [vmem:[%s224 + $0xb4] sm:$0xff]
      %v268 = vld [vmem:[%s224 + $0xbc] sm:$0xf]
      %v269 = vld [vmem:[%s224 + $0xc0] sm:$0xff]
      %v270 = vld [vmem:[%s224 + $0xc8] sm:$0xf]
      %v271 = vld [vmem:[%s224 + $0xcc] sm:$0xff]
      %v272 = vld [vmem:[%s224 + $0xd4] sm:$0xf]
      %v273 = vld [vmem:[%s213] sm:$0x7]
      %v276 = vunpack.c.l.s4 1966171168
      %v277 = vunpack.c.0.s8 %v276
      %v278 = vlaneseq
      %v279 = vshrl.u32 %v278, 7
      %v280 = vsub.s32 %v277, %v279
      %v281 = vrot.slane %v273, %v280
      %v282 = vcombine.high %v281, %v281
      %v284 = vunpack.c.l.s4 1966171168
      %v285 = vunpack.c.0.s8 %v284
      %v286 = vlaneseq
      %v287 = vshrl.u32 %v286, 7
      %v288 = vsub.s32 %v285, %v287
      %v289 = vrot.slane %v281, %v288
      %v291 = vunpack.c.l.s4 1966171168
      %v292 = vunpack.c.0.s8 %v291
      %v293 = vlaneseq
      %v294 = vshrl.u32 %v293, 7
      %v295 = vsub.s32 %v292, %v294
      %v296 = vrot.slane %v282, %v295
      %v297 = vcombine.high %v289, %v289
      %v299 = vpack.i.b16 %v289, %v289
      %v301 = vlaneseq
      %v302 = vshrl.u32 %v301, 7
      %v303 = vsub.s32 0, %v302
      %v304 = vrot.slane %v299, %v303
      %v306 = vpack.i.b16 %v296, %v296
      %v308 = vlaneseq
      %v309 = vshrl.u32 %v308, 7
      %v310 = vsub.s32 0, %v309
      %v311 = vrot.slane %v306, %v310
      %v313 = vpack.i.b16 %v297, %v297
      %v315 = vlaneseq
      %v316 = vshrl.u32 %v315, 7
      %v317 = vsub.s32 0, %v316
      %v318 = vrot.slane %v313, %v317
      %v322 = vunpack.c.l.b16 %v304
      %v323 = vunpack.c.l.b16 %v311
      %v324 = vunpack.c.l.b16 %v318
      %v325 = vpack.c.b16 %v323, %v322
      %v326 = vpack.c.b16 %v324, %v324
      %v329 = vmul.bf16 %v237, %v325
      %v330 = vmul.bf16 %v238, %v326
      %v331 = vmul.bf16 %v239, %v325
      %v332 = vmul.bf16 %v240, %v326
      %v333 = vmul.bf16 %v241, %v325
      %v334 = vmul.bf16 %v242, %v326
      %v335 = vmul.bf16 %v243, %v325
      %v336 = vmul.bf16 %v244, %v326
      %v337 = vmul.bf16 %v245, %v325
      %v338 = vmul.bf16 %v246, %v326
      %v339 = vmul.bf16 %v247, %v325
      %v340 = vmul.bf16 %v248, %v326
      %v341 = vmul.bf16 %v249, %v325
      %v342 = vmul.bf16 %v250, %v326
      %v343 = vmul.bf16 %v251, %v325
      %v344 = vmul.bf16 %v252, %v326
      %v345 = vmul.bf16 %v253, %v325
      %v346 = vmul.bf16 %v254, %v326
      %v347 = vmul.bf16 %v255, %v325
      %v348 = vmul.bf16 %v256, %v326
      %v349 = vmul.bf16 %v257, %v325
      %v350 = vmul.bf16 %v258, %v326
      %v351 = vmul.bf16 %v259, %v325
      %v352 = vmul.bf16 %v260, %v326
      %v353 = vmul.bf16 %v261, %v325
      %v354 = vmul.bf16 %v262, %v326
      %v355 = vmul.bf16 %v263, %v325
      %v356 = vmul.bf16 %v264, %v326
      %v357 = vmul.bf16 %v265, %v325
      %v358 = vmul.bf16 %v266, %v326
      %v359 = vmul.bf16 %v267, %v325
      %v360 = vmul.bf16 %v268, %v326
      %v361 = vmul.bf16 %v269, %v325
      %v362 = vmul.bf16 %v270, %v326
      %v363 = vmul.bf16 %v271, %v325
      %v364 = vmul.bf16 %v272, %v326
      %v365 = vld [vmem:[%s218] sm:$0xf]
      %v366 = vld [vmem:[%s218 + $0x4] sm:$0xf]
      %v367 = vld [vmem:[%s218 + $0x8] sm:$0xf]
      %v368 = vld [vmem:[%s218 + $0xc] sm:$0xf]
      %v369 = vld [vmem:[%s218 + $0x10] sm:$0xf]
      %v370 = vld [vmem:[%s218 + $0x14] sm:$0xf]
      %v371 = vld [vmem:[%s218 + $0x18] sm:$0xf]
      %v372 = vld [vmem:[%s218 + $0x1c] sm:$0xf]
      %v373 = vld [vmem:[%s218 + $0x20] sm:$0xf]
      %v374 = vld [vmem:[%s218 + $0x24] sm:$0xf]
      %v375 = vld [vmem:[%s218 + $0x28] sm:$0xf]
      %v376 = vld [vmem:[%s218 + $0x2c] sm:$0xf]
      %v377 = vld [vmem:[%s218 + $0x30] sm:$0xf]
      %v378 = vld [vmem:[%s218 + $0x34] sm:$0xf]
      %v379 = vld [vmem:[%s218 + $0x38] sm:$0xf]
      %v380 = vld [vmem:[%s218 + $0x3c] sm:$0xf]
      %v381 = vld [vmem:[%s218 + $0x40] sm:$0xf]
      %v382 = vld [vmem:[%s218 + $0x44] sm:$0xf]
      %v383 = vld [vmem:[%s218 + $0x48] sm:$0xf]
      %v384 = vld [vmem:[%s218 + $0x4c] sm:$0xf]
      %v385 = vld [vmem:[%s218 + $0x50] sm:$0xf]
      %v386 = vld [vmem:[%s218 + $0x54] sm:$0xf]
      %v387 = vld [vmem:[%s218 + $0x58] sm:$0xf]
      %v388 = vld [vmem:[%s218 + $0x5c] sm:$0xf]
      %v389 = vld [vmem:[%s218 + $0x60] sm:$0xf]
      %v390 = vld [vmem:[%s218 + $0x64] sm:$0xf]
      %v391 = vld [vmem:[%s218 + $0x68] sm:$0xf]
      %v392 = vld [vmem:[%s218 + $0x6c] sm:$0xf]
      %v393 = vld [vmem:[%s218 + $0x70] sm:$0xf]
      %v394 = vld [vmem:[%s218 + $0x74] sm:$0xf]
      %v395 = vld [vmem:[%s218 + $0x78] sm:$0xf]
      %v396 = vld [vmem:[%s218 + $0x7c] sm:$0xf]
      %v397 = vld [vmem:[%s218 + $0x80] sm:$0xf]
      %v398 = vld [vmem:[%s218 + $0x84] sm:$0xf]
      %v399 = vld [vmem:[%s218 + $0x88] sm:$0xf]
      %v400 = vld [vmem:[%s218 + $0x8c] sm:$0xf]
      %v401 = vld [vmem:[%s218 + $0x90] sm:$0xf]
      %v402 = vld [vmem:[%s218 + $0x94] sm:$0xf]
      %v403 = vld [vmem:[%s218 + $0x98] sm:$0xf]
      %v404 = vld [vmem:[%s218 + $0x9c] sm:$0xf]
      %v405 = vld [vmem:[%s218 + $0xa0] sm:$0xf]
      %v406 = vld [vmem:[%s218 + $0xa4] sm:$0xf]
      %v407 = vld [vmem:[%s218 + $0xa8] sm:$0xf]
      %v408 = vld [vmem:[%s218 + $0xac] sm:$0xf]
      %v409 = vld [vmem:[%s218 + $0xb0] sm:$0xf]
      %v410 = vld [vmem:[%s218 + $0xb4] sm:$0xf]
      %v411 = vld [vmem:[%s218 + $0xb8] sm:$0xf]
      %v412 = vld [vmem:[%s218 + $0xbc] sm:$0xf]
      %v449 = vunpack.c.l.b16 %v329
      %v450 = vunpack.c.h.b16 %v329
      %v451 = vunpack.c.l.b16 %v330
      %v452 = vunpack.c.l.b16 %v331
      %v453 = vunpack.c.h.b16 %v331
      %v454 = vunpack.c.l.b16 %v332
      %v455 = vunpack.c.l.b16 %v333
      %v456 = vunpack.c.h.b16 %v333
      %v457 = vunpack.c.l.b16 %v334
      %v458 = vunpack.c.l.b16 %v335
      %v459 = vunpack.c.h.b16 %v335
      %v460 = vunpack.c.l.b16 %v336
      %v461 = vunpack.c.l.b16 %v337
      %v462 = vunpack.c.h.b16 %v337
      %v463 = vunpack.c.l.b16 %v338
      %v464 = vunpack.c.l.b16 %v339
      %v465 = vunpack.c.h.b16 %v339
      %v466 = vunpack.c.l.b16 %v340
      %v467 = vunpack.c.l.b16 %v341
      %v468 = vunpack.c.h.b16 %v341
      %v469 = vunpack.c.l.b16 %v342
      %v470 = vunpack.c.l.b16 %v343
      %v471 = vunpack.c.h.b16 %v343
      %v472 = vunpack.c.l.b16 %v344
      %v473 = vunpack.c.l.b16 %v345
      %v474 = vunpack.c.h.b16 %v345
      %v475 = vunpack.c.l.b16 %v346
      %v476 = vunpack.c.l.b16 %v347
      %v477 = vunpack.c.h.b16 %v347
      %v478 = vunpack.c.l.b16 %v348
      %v479 = vunpack.c.l.b16 %v349
      %v480 = vunpack.c.h.b16 %v349
      %v481 = vunpack.c.l.b16 %v350
      %v482 = vunpack.c.l.b16 %v351
      %v483 = vunpack.c.h.b16 %v351
      %v484 = vunpack.c.l.b16 %v352
      %v485 = vunpack.c.l.b16 %v353
      %v486 = vunpack.c.h.b16 %v353
      %v487 = vunpack.c.l.b16 %v354
      %v488 = vunpack.c.l.b16 %v355
      %v489 = vunpack.c.h.b16 %v355
      %v490 = vunpack.c.l.b16 %v356
      %v491 = vunpack.c.l.b16 %v357
      %v492 = vunpack.c.h.b16 %v357
      %v493 = vunpack.c.l.b16 %v358
      %v494 = vunpack.c.l.b16 %v359
      %v495 = vunpack.c.h.b16 %v359
      %v496 = vunpack.c.l.b16 %v360
      %v497 = vunpack.c.l.b16 %v361
      %v498 = vunpack.c.h.b16 %v361
      %v499 = vunpack.c.l.b16 %v362
      %v500 = vunpack.c.l.b16 %v363
      %v501 = vunpack.c.h.b16 %v363
      %v502 = vunpack.c.l.b16 %v364
      %v503 = vpack.c.b16 %v452, %v449
      %v504 = vpack.c.b16 %v453, %v450
      %v505 = vpack.c.b16 %v454, %v451
      %v506 = vpack.c.b16 %v458, %v455
      %v507 = vpack.c.b16 %v459, %v456
      %v508 = vpack.c.b16 %v460, %v457
      %v509 = vpack.c.b16 %v464, %v461
      %v510 = vpack.c.b16 %v465, %v462
      %v511 = vpack.c.b16 %v466, %v463
      %v512 = vpack.c.b16 %v470, %v467
      %v513 = vpack.c.b16 %v471, %v468
      %v514 = vpack.c.b16 %v472, %v469
      %v515 = vpack.c.b16 %v476, %v473
      %v516 = vpack.c.b16 %v477, %v474
      %v517 = vpack.c.b16 %v478, %v475
      %v518 = vpack.c.b16 %v482, %v479
      %v519 = vpack.c.b16 %v483, %v480
      %v520 = vpack.c.b16 %v484, %v481
      %v521 = vpack.c.b16 %v488, %v485
      %v522 = vpack.c.b16 %v489, %v486
      %v523 = vpack.c.b16 %v490, %v487
      %v524 = vpack.c.b16 %v494, %v491
      %v525 = vpack.c.b16 %v495, %v492
      %v526 = vpack.c.b16 %v496, %v493
      %v527 = vpack.c.b16 %v500, %v497
      %v528 = vpack.c.b16 %v501, %v498
      %v529 = vpack.c.b16 %v502, %v499
      %v605 = vunpack.c.l.b16 %v365
      %v606 = vunpack.c.l.b16 %v366
      %v607 = vunpack.c.l.b16 %v367
      %v608 = vunpack.c.l.b16 %v368
      %v609 = vunpack.c.l.b16 %v369
      %v610 = vunpack.c.l.b16 %v370
      %v611 = vunpack.c.l.b16 %v371
      %v612 = vunpack.c.l.b16 %v372
      %v613 = vunpack.c.l.b16 %v373
      %v614 = vunpack.c.l.b16 %v374
      %v615 = vunpack.c.l.b16 %v375
      %v616 = vunpack.c.l.b16 %v376
      %v617 = vunpack.c.l.b16 %v377
      %v618 = vunpack.c.l.b16 %v378
      %v619 = vunpack.c.l.b16 %v379
      %v620 = vunpack.c.l.b16 %v380
      %v621 = vunpack.c.l.b16 %v381
      %v622 = vunpack.c.l.b16 %v382
      %v623 = vunpack.c.l.b16 %v383
      %v624 = vunpack.c.l.b16 %v384
      %v625 = vunpack.c.l.b16 %v385
      %v626 = vunpack.c.l.b16 %v386
      %v627 = vunpack.c.l.b16 %v387
      %v628 = vunpack.c.l.b16 %v388
      %v629 = vunpack.c.l.b16 %v389
      %v630 = vunpack.c.l.b16 %v390
      %v631 = vunpack.c.l.b16 %v391
      %v632 = vunpack.c.l.b16 %v392
      %v633 = vunpack.c.l.b16 %v393
      %v634 = vunpack.c.l.b16 %v394
      %v635 = vunpack.c.l.b16 %v395
      %v636 = vunpack.c.l.b16 %v396
      %v637 = vunpack.c.l.b16 %v397
      %v638 = vunpack.c.l.b16 %v398
      %v639 = vunpack.c.l.b16 %v399
      %v640 = vunpack.c.l.b16 %v400
      %v641 = vunpack.c.l.b16 %v401
      %v642 = vunpack.c.l.b16 %v402
      %v643 = vunpack.c.l.b16 %v403
      %v644 = vunpack.c.l.b16 %v404
      %v645 = vunpack.c.l.b16 %v405
      %v646 = vunpack.c.l.b16 %v406
      %v647 = vunpack.c.l.b16 %v407
      %v648 = vunpack.c.l.b16 %v408
      %v649 = vunpack.c.l.b16 %v409
      %v650 = vunpack.c.l.b16 %v410
      %v651 = vunpack.c.l.b16 %v411
      %v652 = vunpack.c.l.b16 %v412
      %v653 = vpack.c.b16 %v606, %v605
      %v654 = vpack.c.b16 %v608, %v607
      %v655 = vpack.c.b16 %v610, %v609
      %v656 = vpack.c.b16 %v612, %v611
      %v657 = vpack.c.b16 %v614, %v613
      %v658 = vpack.c.b16 %v616, %v615
      %v659 = vpack.c.b16 %v618, %v617
      %v660 = vpack.c.b16 %v620, %v619
      %v661 = vpack.c.b16 %v622, %v621
      %v662 = vpack.c.b16 %v624, %v623
      %v663 = vpack.c.b16 %v626, %v625
      %v664 = vpack.c.b16 %v628, %v627
      %v665 = vpack.c.b16 %v630, %v629
      %v666 = vpack.c.b16 %v632, %v631
      %v667 = vpack.c.b16 %v634, %v633
      %v668 = vpack.c.b16 %v636, %v635
      %v669 = vpack.c.b16 %v638, %v637
      %v670 = vpack.c.b16 %v640, %v639
      %v671 = vpack.c.b16 %v642, %v641
      %v672 = vpack.c.b16 %v644, %v643
      %v673 = vpack.c.b16 %v646, %v645
      %v674 = vpack.c.b16 %v648, %v647
      %v675 = vpack.c.b16 %v650, %v649
      %v676 = vpack.c.b16 %v652, %v651
      %701 = vmatprep.subr.bf16.mxu0 0
      %702 = vmatpush1.bf16.msra.mxu0 %v653
      %703 = vmatprep.subr.bf16.mxu0 0
      %704 = vmatpush1.bf16.msra.mxu0 %v654
      %705 = vmatprep.subr.bf16.mxu0 0
      %706 = vmatpush1.bf16.msra.mxu0 %v655
      %707 = vmatprep.subr.bf16.mxu0 0
      %708 = vmatpush1.bf16.msra.mxu0 %v656
      %709 = vmatprep.subr.bf16.mxu0 0
      %710 = vmatpush1.bf16.msra.mxu0 %v657
      %711 = vmatprep.subr.bf16.mxu0 0
      %712 = vmatpush1.bf16.msra.mxu0 %v658
      %713 = vmatprep.subr.bf16.mxu0 0
      %714 = vmatpush1.bf16.msra.mxu0 %v659
      %715 = vmatprep.subr.bf16.mxu0 0
      %716 = vmatpush1.bf16.msra.mxu0 %v660
      %717 = vmatprep.subr.bf16.mxu0 0
      %718 = vmatpush1.bf16.msra.mxu0 %v661
      %719 = vmatprep.subr.bf16.mxu0 0
      %720 = vmatpush1.bf16.msra.mxu0 %v662
      %721 = vmatprep.subr.bf16.mxu0 0
      %722 = vmatpush1.bf16.msra.mxu0 %v663
      %723 = vmatprep.subr.bf16.mxu0 0
      %724 = vmatpush1.bf16.msra.mxu0 %v664
      %725 = vmatprep.subr.bf16.mxu0 0
      %726 = vmatpush1.bf16.msra.mxu0 %v665
      %727 = vmatprep.subr.bf16.mxu0 0
      %728 = vmatpush1.bf16.msra.mxu0 %v666
      %729 = vmatprep.subr.bf16.mxu0 0
      %730 = vmatpush1.bf16.msra.mxu0 %v667
      %731 = vmatprep.subr.bf16.mxu0 0
      %732 = vmatpush1.bf16.msra.mxu0 %v668
      %733 = vmatprep.mubr.bf16.mxu0 %v504
      %734 = vmatmul.mubr.bf16.gmra.mrb[0].mxu0 %v503
      %v735 = vpop.f32.mrb[0].mxu0
      %v736 = vadd.f32 0.0, %v735
      %v737 = vpop.f32.mrb[0].mxu0
      %v738 = vpop.f32.mrb[0].mxu0
      %v739 = vadd.f32 0.0, %v738
      %v740 = vpop.f32.mrb[0].mxu0
      %741 = vmatprep.mubr.bf16.mxu0 %v507
      %742 = vmatmul.mubr.bf16.gmra.mrb[0].mxu0 %v506
      %v743 = vpop.f32.mrb[0].mxu0
      %v744 = vadd.f32 0.0, %v743
      %v745 = vpop.f32.mrb[0].mxu0
      %v746 = vpop.f32.mrb[0].mxu0
      %v747 = vadd.f32 0.0, %v746
      %v748 = vpop.f32.mrb[0].mxu0
      %749 = vmatprep.mubr.bf16.mxu0 %v510
      %750 = vmatmul.mubr.bf16.gmra.mrb[0].mxu0 %v509
      %v751 = vpop.f32.mrb[0].mxu0
      %v752 = vadd.f32 0.0, %v751
      %v753 = vpop.f32.mrb[0].mxu0
      %v754 = vpop.f32.mrb[0].mxu0
      %v755 = vadd.f32 0.0, %v754
      %v756 = vpop.f32.mrb[0].mxu0
      %757 = vmatprep.mubr.bf16.mxu0 %v513
      %758 = vmatmul.mubr.bf16.gmra.mrb[0].mxu0 %v512
      %v759 = vpop.f32.mrb[0].mxu0
      %v760 = vadd.f32 0.0, %v759
      %v761 = vpop.f32.mrb[0].mxu0
      %v762 = vpop.f32.mrb[0].mxu0
      %v763 = vadd.f32 0.0, %v762
      %v764 = vpop.f32.mrb[0].mxu0
      %765 = vmatprep.mubr.bf16.mxu0 %v516
      %766 = vmatmul.mubr.bf16.gmra.mrb[0].mxu0 %v515
      %v767 = vpop.f32.mrb[0].mxu0
      %v768 = vadd.f32 0.0, %v767
      %v769 = vpop.f32.mrb[0].mxu0
      %v770 = vpop.f32.mrb[0].mxu0
      %v771 = vadd.f32 0.0, %v770
      %v772 = vpop.f32.mrb[0].mxu0
      %773 = vmatprep.mubr.bf16.mxu0 %v519
      %774 = vmatmul.mubr.bf16.gmra.mrb[0].mxu0 %v518
      %v775 = vpop.f32.mrb[0].mxu0
      %v776 = vadd.f32 0.0, %v775
      %v777 = vpop.f32.mrb[0].mxu0
      %v778 = vpop.f32.mrb[0].mxu0
      %v779 = vadd.f32 0.0, %v778
      %v780 = vpop.f32.mrb[0].mxu0
      %781 = vmatprep.mubr.bf16.mxu0 %v522
      %782 = vmatmul.mubr.bf16.gmra.mrb[0].mxu0 %v521
      %v783 = vpop.f32.mrb[0].mxu0
      %v784 = vadd.f32 0.0, %v783
      %v785 = vpop.f32.mrb[0].mxu0
      %v786 = vpop.f32.mrb[0].mxu0
      %v787 = vadd.f32 0.0, %v786
      %v788 = vpop.f32.mrb[0].mxu0
      %789 = vmatprep.mubr.bf16.mxu0 %v525
      %790 = vmatmul.mubr.bf16.gmra.mrb[0].mxu0 %v524
      %v791 = vpop.f32.mrb[0].mxu0
      %v792 = vadd.f32 0.0, %v791
      %v793 = vpop.f32.mrb[0].mxu0
      %v794 = vpop.f32.mrb[0].mxu0
      %v795 = vadd.f32 0.0, %v794
      %v796 = vpop.f32.mrb[0].mxu0
      %797 = vmatprep.mubr.bf16.mxu0 %v528
      %798 = vmatmul.mubr.bf16.gmra.mrb[0].mxu0 %v527
      %v799 = vpop.f32.mrb[0].mxu0
      %v800 = vadd.f32 0.0, %v799
      %v801 = vpop.f32.mrb[0].mxu0
      %v802 = vpop.f32.mrb[0].mxu0
      %v803 = vadd.f32 0.0, %v802
      %v804 = vpop.f32.mrb[0].mxu0
      %805 = vdwg.mxu0
      %806 = vmatprep.subr.bf16.mxu0 0
      %807 = vmatpush1.bf16.msra.mxu0 %v669
      %808 = vmatprep.subr.bf16.mxu0 0
      %809 = vmatpush1.bf16.msra.mxu0 %v670
      %810 = vmatprep.subr.bf16.mxu0 0
      %811 = vmatpush1.bf16.msra.mxu0 %v671
      %812 = vmatprep.subr.bf16.mxu0 0
      %813 = vmatpush1.bf16.msra.mxu0 %v672
      %814 = vmatprep.subr.bf16.mxu0 0
      %815 = vmatpush1.bf16.msra.mxu0 %v673
      %816 = vmatprep.subr.bf16.mxu0 0
      %817 = vmatpush1.bf16.msra.mxu0 %v674
      %818 = vmatprep.subr.bf16.mxu0 0
      %819 = vmatpush1.bf16.msra.mxu0 %v675
      %820 = vmatprep.subr.bf16.mxu0 0
      %821 = vmatpush1.bf16.msra.mxu0 %v676
      %822 = vmatprep.subr.bf16.mxu0 0
      %823 = vmatpush1.bf16.msra.mxu0 0
      %824 = vmatprep.subr.bf16.mxu0 0
      %825 = vmatpush1.bf16.msra.mxu0 0
      %826 = vmatprep.subr.bf16.mxu0 0
      %827 = vmatpush1.bf16.msra.mxu0 0
      %828 = vmatprep.subr.bf16.mxu0 0
      %829 = vmatpush1.bf16.msra.mxu0 0
      %830 = vmatprep.subr.bf16.mxu0 0
      %831 = vmatpush1.bf16.msra.mxu0 0
      %832 = vmatprep.subr.bf16.mxu0 0
      %833 = vmatpush1.bf16.msra.mxu0 0
      %834 = vmatprep.subr.bf16.mxu0 0
      %835 = vmatpush1.bf16.msra.mxu0 0
      %836 = vmatprep.subr.bf16.mxu0 0
      %837 = vmatpush1.bf16.msra.mxu0 0
      %838 = vmatprep.mubr.bf16.mxu0 0
      %839 = vmatmul.mubr.bf16.gmra.mrb[0].mxu0 %v505
      %v840 = vpop.f32.mrb[0].mxu0
      %v841 = vadd.f32 %v736, %v840
      %v842 = vpop.f32.mrb[0].mxu0
      %v843 = vpop.f32.mrb[0].mxu0
      %v844 = vadd.f32 %v739, %v843
      %v845 = vpop.f32.mrb[0].mxu0
      %846 = vmatprep.mubr.bf16.mxu0 0
      %847 = vmatmul.mubr.bf16.gmra.mrb[0].mxu0 %v508
      %v848 = vpop.f32.mrb[0].mxu0
      %v849 = vadd.f32 %v744, %v848
      %v850 = vpop.f32.mrb[0].mxu0
      %v851 = vpop.f32.mrb[0].mxu0
      %v852 = vadd.f32 %v747, %v851
      %v853 = vpop.f32.mrb[0].mxu0
      %854 = vmatprep.mubr.bf16.mxu0 0
      %855 = vmatmul.mubr.bf16.gmra.mrb[0].mxu0 %v511
      %v856 = vpop.f32.mrb[0].mxu0
      %v857 = vadd.f32 %v752, %v856
      %v858 = vpop.f32.mrb[0].mxu0
      %v859 = vpop.f32.mrb[0].mxu0
      %v860 = vadd.f32 %v755, %v859
      %v861 = vpop.f32.mrb[0].mxu0
      %862 = vmatprep.mubr.bf16.mxu0 0
      %863 = vmatmul.mubr.bf16.gmra.mrb[0].mxu0 %v514
      %v864 = vpop.f32.mrb[0].mxu0
      %v865 = vadd.f32 %v760, %v864
      %v866 = vpop.f32.mrb[0].mxu0
      %v867 = vpop.f32.mrb[0].mxu0
      %v868 = vadd.f32 %v763, %v867
      %v869 = vpop.f32.mrb[0].mxu0
      %870 = vmatprep.mubr.bf16.mxu0 0
      %871 = vmatmul.mubr.bf16.gmra.mrb[0].mxu0 %v517
      %v872 = vpop.f32.mrb[0].mxu0
      %v873 = vadd.f32 %v768, %v872
      %v874 = vpop.f32.mrb[0].mxu0
      %v875 = vpop.f32.mrb[0].mxu0
      %v876 = vadd.f32 %v771, %v875
      %v877 = vpop.f32.mrb[0].mxu0
      %878 = vmatprep.mubr.bf16.mxu0 0
      %879 = vmatmul.mubr.bf16.gmra.mrb[0].mxu0 %v520
      %v880 = vpop.f32.mrb[0].mxu0
      %v881 = vadd.f32 %v776, %v880
      %v882 = vpop.f32.mrb[0].mxu0
      %v883 = vpop.f32.mrb[0].mxu0
      %v884 = vadd.f32 %v779, %v883
      %v885 = vpop.f32.mrb[0].mxu0
      %886 = vmatprep.mubr.bf16.mxu0 0
      %887 = vmatmul.mubr.bf16.gmra.mrb[0].mxu0 %v523
      %v888 = vpop.f32.mrb[0].mxu0
      %v889 = vadd.f32 %v784, %v888
      %v890 = vpop.f32.mrb[0].mxu0
      %v891 = vpop.f32.mrb[0].mxu0
      %v892 = vadd.f32 %v787, %v891
      %v893 = vpop.f32.mrb[0].mxu0
      %894 = vmatprep.mubr.bf16.mxu0 0
      %895 = vmatmul.mubr.bf16.gmra.mrb[0].mxu0 %v526
      %v896 = vpop.f32.mrb[0].mxu0
      %v897 = vadd.f32 %v792, %v896
      %v898 = vpop.f32.mrb[0].mxu0
      %v899 = vpop.f32.mrb[0].mxu0
      %v900 = vadd.f32 %v795, %v899
      %v901 = vpop.f32.mrb[0].mxu0
      %902 = vmatprep.mubr.bf16.mxu0 0
      %903 = vmatmul.mubr.bf16.gmra.mrb[0].mxu0 %v529
      %v904 = vpop.f32.mrb[0].mxu0
      %v905 = vadd.f32 %v800, %v904
      %v906 = vpop.f32.mrb[0].mxu0
      %v907 = vpop.f32.mrb[0].mxu0
      %v908 = vadd.f32 %v803, %v907
      %v909 = vpop.f32.mrb[0].mxu0
      %910 = vdwg.mxu0
      %911 = vst [vmem:[%s234] sm:$0xff] %v841
      %912 = vst [vmem:[%s234 + $0x8] sm:$0xff] %v844
      %913 = vst [vmem:[%s234 + $0x10] sm:$0xff] %v849
      %914 = vst [vmem:[%s234 + $0x18] sm:$0xff] %v852
      %915 = vst [vmem:[%s234 + $0x20] sm:$0xff] %v857
      %916 = vst [vmem:[%s234 + $0x28] sm:$0xff] %v860
      %917 = vst [vmem:[%s234 + $0x30] sm:$0xff] %v865
      %918 = vst [vmem:[%s234 + $0x38] sm:$0xff] %v868
      %919 = vst [vmem:[%s234 + $0x40] sm:$0xff] %v873
      %920 = vst [vmem:[%s234 + $0x48] sm:$0xff] %v876
      %921 = vst [vmem:[%s234 + $0x50] sm:$0xff] %v881
      %922 = vst [vmem:[%s234 + $0x58] sm:$0xff] %v884
      %923 = vst [vmem:[%s234 + $0x60] sm:$0xff] %v889
      %924 = vst [vmem:[%s234 + $0x68] sm:$0xff] %v892
      %925 = vst [vmem:[%s234 + $0x70] sm:$0xff] %v897
      %926 = vst [vmem:[%s234 + $0x78] sm:$0xff] %v900
      %927 = vst [vmem:[%s234 + $0x80] sm:$0xff] %v905
      %928 = vst [vmem:[%s234 + $0x88] sm:$0xff] %v908
      %s929 = smul.u32 18, %s18
      %p930 = scmp.lt.s32.totalorder %s19, 0
      %s931 = scalar_select %p930, %s19, 0
      %p932 = scmp.lt.s32.totalorder %s929, 71
      %s933 = scalar_select %p932, %s929, 71
      %s934 = smul.addr %s931, 72
      %s935 = sadd.s32 %s933, %s934
      %s936 = smul.addr %s935, 8
      %s937 = scalar_lea.vmem %s3, %s936
      // Predicated region
      $region33: #{module_forward.1} parent=31 // pred_check
        %p938 = pneg %p124
      $region34: #{module_forward.1} parent=31 // pred_check_branch
        %940 = sbr.rel (%p938) target = $region36
      $region35: #{module_forward.1} parent=31 // pred_region
        %s941 = smul.u32 18, %s18
      $region36: #{module_forward.1} parent=31 // pred_fallthru
        _
    $region32: #{module_forward.1} parent=5 // pred_fallthru
      _
    %p942 = scmp.le.s32.totalorder 2, %s9
    // Predicated region
    $region37: #{module_forward.1} parent=5 // pred_check
      %p943 = pneg %p942
    $region38: #{module_forward.1} parent=5 // pred_check_branch
      %945 = sbr.rel (%p943) target = $region40
    $region39: #{module_forward.1} parent=5 // pred_region
      %s946 = ssub.s32 %s9, 2
      // Predicated region
      $region41: #{module_forward.1} parent=39 // pred_check
        %p947 = pneg %p130
      $region42: #{module_forward.1} parent=39 // pred_check_branch
        %949 = sbr.rel (%p947) target = $region44
      $region43: #{module_forward.1} parent=39 // pred_region
        %s950 = smul.u32 18, %s20
        %p951 = scmp.lt.s32.totalorder %s21, 0
        %s952 = scalar_select %p951, %s21, 0
        %p953 = scmp.lt.s32.totalorder %s950, 71
        %s954 = scalar_select %p953, %s950, 71
        %s955 = smul.addr %s952, 72
        %s956 = sadd.s32 %s954, %s955
        %s957 = smul.addr %s956, 8
        %s958 = scalar_lea.vmem %s3, %s957
      $region44: #{module_forward.1} parent=39 // pred_fallthru
        _
    $region40: #{module_forward.1} parent=5 // pred_fallthru
      _
  $region6: #{module_forward.1} parent=0 // loop_footer
    %s13 = sadd.s32 1, %s9
  $region7: #{module_forward.1} parent=0 // loop_footer_branch
    %8 = sbr.rel target = $region3
  $region8: #{module_forward.1} parent=0 // loop_exit
    _

</llo_original>
